<compile_context>
chip_gen: v5e
topology: v5e:2x2
jax: 0.10.0
libtpu: 0.0.40
codegen_flags: <defaults>
</compile_context>

<pallas_src>
import functools
import math

import jax
import jax.numpy as jnp
import numpy as np
from jax.experimental import pallas as pl


# ============================================================================
# Pallas kernels (all gridless: every operand is a single VMEM-resident block)
# ============================================================================
def _dense_layer_kernel(x_ref, s1_ref, b1_ref, w1_ref, s2_ref, b2_ref,
                        w2_ref, mask_ref, o_ref, *, taps):
    """One fused DenseNet-121 dense layer.

    BN1(+ReLU) -> 1x1 conv -> BN2(+ReLU) -> 3x3 conv (stride 1, pad 1).

    x_ref    : (M, Cp)     flattened NHWC activations (M = B*H*W), channel-padded
    s1/b1    : (1, Cp)     BN1 scale / bias (zero on padded channels)
    w1_ref   : (Cp, 128)   1x1 conv weight, bf16 (zero rows on padded channels)
    s2/b2    : (1, 128)    BN2 scale / bias
    w2_ref   : (9, 128, 32) 3x3 conv weight (tap-major di*3+dj), bf16
    mask_ref : (M, T)      per-output-row validity of each kept tap (0/1, f32)
    o_ref    : (M, 32)     the 32 new feature channels
    taps     : static tuple of (tap_id, row_shift) for taps that are ever in-bounds
    """
    m = x_ref.shape[0]
    # BN1 + ReLU in f32, then bf16 operands for the MXU (f32 accumulation).
    a = jnp.maximum(x_ref[...] * s1_ref[...] + b1_ref[...], 0.0)
    h = jnp.dot(a.astype(jnp.bfloat16), w1_ref[...],
                preferred_element_type=jnp.float32)
    # BN2 + ReLU in f32.
    h = jnp.maximum(h * s2_ref[...] + b2_ref[...], 0.0)

    # 3x3 conv as shifted-row taps of the flattened (M, 128) map.  A zero apron of
    # `pad` rows on both sides turns every tap into a static slice; `mask` zeroes the
    # rows whose source pixel falls outside the HxW image (incl. batch crossings).
    pad = max(abs(s) for _, s in taps)
    if pad > 0:
        z = jnp.zeros((pad, h.shape[1]), jnp.float32)
        hp = jnp.concatenate([z, h, z], axis=0)
    else:
        hp = h
    acc = jnp.zeros((m, o_ref.shape[1]), jnp.float32)
    for t, (tap_id, shift) in enumerate(taps):
        sh = hp[pad + shift: pad + shift + m, :] * mask_ref[:, t:t + 1]
        acc = acc + jnp.dot(sh.astype(jnp.bfloat16), w2_ref[tap_id],
                            preferred_element_type=jnp.float32)
    o_ref[...] = acc


def _bnrelu_matmul_kernel(x_ref, s_ref, b_ref, w_ref, o_ref):
    # y = relu(x * s + b) @ w      (transition layers: BN+ReLU fused as prologue)
    a = jnp.maximum(x_ref[...] * s_ref[...] + b_ref[...], 0.0)
    o_ref[...] = jnp.dot(a.astype(jnp.bfloat16), w_ref[...],
                         preferred_element_type=jnp.float32)


def _matmul_bnrelu_kernel(x_ref, w_ref, s_ref, b_ref, o_ref):
    # y = relu((x @ w) * s + b)    (stem conv0: norm0+ReLU fused as epilogue)
    y = jnp.dot(x_ref[...].astype(jnp.bfloat16), w_ref[...],
                preferred_element_type=jnp.float32)
    o_ref[...] = jnp.maximum(y * s_ref[...] + b_ref[...], 0.0)


def _classblock_kernel(x_ref, s5_ref, b5_ref, w1_ref, b1_ref, s_ref, bb_ref,
                       w2_ref, b2_ref, logit_ref, f_ref):
    # norm5 (per-channel affine; commutes with the global average pool) + ClassBlock:
    # Linear(1024->512) -> BatchNorm1d -> [f = x/(||x||_2+1e-8)] -> Linear(512->classes)
    x = x_ref[...] * s5_ref[...] + b5_ref[...]
    h = jnp.dot(x, w1_ref[...], preferred_element_type=jnp.float32) + b1_ref[...]
    h = h * s_ref[...] + bb_ref[...]
    nrm = jnp.sqrt(jnp.sum(h * h, axis=1, keepdims=True)) + 1e-8
    f_ref[...] = h / nrm
    logit_ref[...] = jnp.dot(h, w2_ref[...],
                             preferred_element_type=jnp.float32) + b2_ref[...]


# ============================================================================
# thin jitted wrappers (one compile per unique shape; ~10 total for the net)
# ============================================================================
@functools.partial(jax.jit, static_argnames=("taps",))
def dense_layer_pallas(x2d, s1, b1, w1, s2, b2, w2, mask, *, taps):
    m = x2d.shape[0]
    return pl.pallas_call(
        functools.partial(_dense_layer_kernel, taps=taps),
        out_shape=jax.ShapeDtypeStruct((m, w2.shape[-1]), jnp.float32),
    )(x2d, s1, b1, w1, s2, b2, w2, mask)


@jax.jit
def bnrelu_matmul_pallas(x2d, s, b, w):
    return pl.pallas_call(
        _bnrelu_matmul_kernel,
        out_shape=jax.ShapeDtypeStruct((x2d.shape[0], w.shape[1]), jnp.float32),
    )(x2d, s, b, w)


@jax.jit
def matmul_bnrelu_pallas(a, w, s, b):
    return pl.pallas_call(
        _matmul_bnrelu_kernel,
        out_shape=jax.ShapeDtypeStruct((a.shape[0], w.shape[1]), jnp.float32),
    )(a, w, s, b)


@jax.jit
def classblock_pallas(feat, s5, b5, w1, b1, bn_s, bn_b, w2, b2):
    B = feat.shape[0]
    return pl.pallas_call(
        _classblock_kernel,
        out_shape=(jax.ShapeDtypeStruct((B, w2.shape[1]), jnp.float32),
                   jax.ShapeDtypeStruct((B, w1.shape[1]), jnp.float32)),
    )(feat, s5, b5, w1, b1, bn_s, bn_b, w2, b2)


# ============================================================================
# plain-JAX glue (cheap, tiny tensors): static tap tables, stem im2col, pooling
# ============================================================================
def _conv3x3_taps(B, H, W):
    """Static tap table for the in-kernel 3x3/pad-1 conv on flattened (B*H*W, C) rows."""
    r = np.arange(B * H * W)
    i_idx = (r // W) % H
    j_idx = r % W
    taps, cols = [], []
    for di in range(3):
        for dj in range(3):
            ii, jj = i_idx + di - 1, j_idx + dj - 1
            valid = (ii >= 0) & (ii < H) & (jj >= 0) & (jj < W)
            if not valid.any():
                continue                      # tap never in-bounds (e.g. 1x1 feature maps)
            taps.append((di * 3 + dj, (di - 1) * W + (dj - 1)))
            cols.append(valid.astype(np.float32))
    return tuple(taps), jnp.asarray(np.stack(cols, axis=1))


def _im2col(x, kh, kw, stride, pad):
    B, H, W, C = x.shape
    xp = jnp.pad(x, ((0, 0), (pad, pad), (pad, pad), (0, 0)))
    OH = (H + 2 * pad - kh) // stride + 1
    OW = (W + 2 * pad - kw) // stride + 1
    cols = []
    for i in range(kh):
        for j in range(kw):
            cols.append(xp[:, i:i + stride * OH:stride,
                           j:j + stride * OW:stride, :])
    return jnp.concatenate(cols, axis=-1), OH, OW


def maxpool_3x3_s2_p1(x):
    B, H, W, C = x.shape
    xp = jnp.pad(x, ((0, 0), (1, 1), (1, 1), (0, 0)), constant_values=-jnp.inf)
    OH = (H + 2 - 3) // 2 + 1
    OW = (W + 2 - 3) // 2 + 1
    out = None
    for i in range(3):
        for j in range(3):
            s = xp[:, i:i + 2 * OH:2, j:j + 2 * OW:2, :]
            out = s if out is None else jnp.maximum(out, s)
    return out


def avgpool_2x2_s2(x):
    return (x[:, ::2, ::2, :] + x[:, 1::2, ::2, :] +
            x[:, ::2, 1::2, :] + x[:, 1::2, 1::2, :]) * 0.25


# ============================================================================
# deterministic synthetic parameters (DenseNet-121 + ClassBlock), pre-padded
# ============================================================================
class ParamGen:
    def __init__(self, key):
        self._key = key
        self._n = 0

    def normal(self, shape, std=1.0, mean=0.0):
        self._n += 1
        k = jax.random.fold_in(self._key, self._n)
        return mean + std * jax.random.normal(k, shape, jnp.float32)

    def conv(self, kh, kw, ic, oc):
        return self.normal((kh, kw, ic, oc), std=math.sqrt(2.0 / (kh * kw * ic)))


def bn_scale_bias(c, gamma=None, beta=None, eps=1e-5):
    # eval-mode BN (running mean=0, var=1) folded into a scale/bias pair
    gamma = jnp.ones((c,), jnp.float32) if gamma is None else gamma
    beta = jnp.zeros((c,), jnp.float32) if beta is None else beta
    scale = gamma / jnp.sqrt(jnp.ones((c,), jnp.float32) + eps)
    bias = beta
    return scale, bias


def build_params(key, class_num):
    pg = ParamGen(key)
    p = {}

    # stem: conv0 (7x7 / stride 2 / pad 3) + norm0 ; K padded 147 -> 256 for lane alignment
    w0 = pg.conv(7, 7, 3, 64).reshape(7 * 7 * 3, 64)
    p["conv0_w"] = (jnp.zeros((256, 64), jnp.float32).at[:147].set(w0)
                    .astype(jnp.bfloat16))
    s0, b0 = bn_scale_bias(64)
    p["norm0_s"], p["norm0_b"] = s0.reshape(1, 64), b0.reshape(1, 64)

    blocks, transitions = [], []
    c = 64
    cfg = (6, 12, 24, 16)                    # DenseNet-121: growth 32, bn_size 4
    for bi, n_layers in enumerate(cfg):
        cp = c + 32 * n_layers               # block channel capacity (multiple of 128)
        layers = []
        for _ in range(n_layers):
            s1, b1 = bn_scale_bias(c)
            w1 = pg.conv(1, 1, c, 128).reshape(c, 128)
            s2, b2 = bn_scale_bias(128)
            w2 = pg.conv(3, 3, 128, 32).reshape(9, 128, 32)
            layers.append({
                "s1": jnp.zeros((1, cp), jnp.float32).at[0, :c].set(s1),
                "b1": jnp.zeros((1, cp), jnp.float32).at[0, :c].set(b1),
                "w1": (jnp.zeros((cp, 128), jnp.float32).at[:c].set(w1)
                       .astype(jnp.bfloat16)),
                "s2": s2.reshape(1, 128),
                "b2": b2.reshape(1, 128),
                "w2": w2.astype(jnp.bfloat16),
            })
            c += 32
        blocks.append(layers)
        if bi != len(cfg) - 1:
            st, bt = bn_scale_bias(c)
            transitions.append({
                "s": st.reshape(1, c),
                "b": bt.reshape(1, c),
                "w": pg.conv(1, 1, c, c // 2).reshape(c, c // 2).astype(jnp.bfloat16),
            })
            c //= 2
    p["blocks"], p["transitions"] = blocks, transitions

    s5, b5 = bn_scale_bias(c)                # c == 1024
    p["norm5_s"], p["norm5_b"] = s5.reshape(1, c), b5.reshape(1, c)

    gamma = pg.normal((512,), std=0.02, mean=1.0)    # weights_init_kaiming (BatchNorm1d)
    hs, hb = bn_scale_bias(512, gamma=gamma)
    p["head"] = {
        "w1": pg.normal((1024, 512), std=math.sqrt(2.0 / 512)),   # kaiming fan_out
        "b1": jnp.zeros((1, 512), jnp.float32),
        "bn_s": hs.reshape(1, 512),
        "bn_b": hb.reshape(1, 512),
        "w2": pg.normal((512, class_num), std=0.001),             # weights_init_classifier
        "b2": jnp.zeros((1, class_num), jnp.float32),
    }
    return p


# ============================================================================
# forward pass (matches ft_net_dense.forward, eval mode)
# ============================================================================
def ft_net_dense_forward(x_nchw, params):
    x = jnp.transpose(x_nchw, (0, 2, 3, 1)).astype(jnp.float32)   # NCHW -> NHWC
    B = x.shape[0]

    # --- stem: conv0 via im2col, norm0+ReLU fused as epilogue, then 3x3/s2 maxpool ---
    cols, OH, OW = _im2col(x, 7, 7, 2, 3)
    a = cols.reshape(B * OH * OW, 7 * 7 * 3)
    a = jnp.pad(a, ((0, 0), (0, params["conv0_w"].shape[0] - a.shape[1])))
    y = matmul_bnrelu_pallas(a, params["conv0_w"],
                             params["norm0_s"], params["norm0_b"])
    h = maxpool_3x3_s2_p1(y.reshape(B, OH, OW, 64))
    _, H, W, C = h.shape
    x2d = h.reshape(B * H * W, C)

    # --- dense blocks (+ transitions); activations live in a (B*H*W, Cp) padded buffer ---
    n_blocks = len(params["blocks"])
    for bi, layers in enumerate(params["blocks"]):
        Cp = C + 32 * len(layers)            # block channel capacity (multiple of 128)
        x2d = jnp.pad(x2d, ((0, 0), (0, Cp - C)))
        taps, mask = _conv3x3_taps(B, H, W)
        for lp in layers:
            new = dense_layer_pallas(x2d, lp["s1"], lp["b1"], lp["w1"],
                                     lp["s2"], lp["b2"], lp["w2"], mask, taps=taps)
            x2d = jax.lax.dynamic_update_slice(x2d, new, (0, C))
            C += 32
        if bi < n_blocks - 1:
            tp = params["transitions"][bi]
            y = bnrelu_matmul_pallas(x2d, tp["s"], tp["b"], tp["w"])   # (M, C//2)
            y = avgpool_2x2_s2(y.reshape(B, H, W, C // 2))
            _, H, W, C = y.shape
            x2d = y.reshape(B * H * W, C)

    # --- norm5 (per-channel affine, commutes with avg-pool) + global pool + ClassBlock ---
    feat = jnp.mean(x2d.reshape(B, H, W, C), axis=(1, 2))         # (B, 1024)
    hd = params["head"]
    # TODO(synk): Dropout(p=0.5) inside ClassBlock is eval-mode identity and therefore omitted.
    logits, f = classblock_pallas(feat, params["norm5_s"], params["norm5_b"],
                                  hd["w1"], hd["b1"], hd["bn_s"], hd["bn_b"],
                                  hd["w2"], hd["b2"])
    return logits, f


# ============================================================================
# small self-check of the fused dense-layer kernel against plain JAX (lax.conv)
# ============================================================================
def _dense_layer_reference(x4, s1, b1, w1, s2, b2, w2_33):
    a = jnp.maximum(x4 * s1.reshape(1, 1, 1, -1) + b1.reshape(1, 1, 1, -1), 0.0)
    h = jnp.einsum("bhwc,cd->bhwd", a, w1)
    h = jnp.maximum(h * s2.reshape(1, 1, 1, -1) + b2.reshape(1, 1, 1, -1), 0.0)
    return jax.lax.conv_general_dilated(
        h, w2_33, window_strides=(1, 1), padding="SAME",
        dimension_numbers=("NHWC", "HWIO", "NHWC"))


def _check_dense_layer_kernel():
    k = jax.random.PRNGKey(7)
    B, H, W, C = 2, 4, 4, 64
    ks = jax.random.split(k, 7)
    x4 = jax.random.normal(ks[0], (B, H, W, C), jnp.float32)
    s1 = 1.0 + 0.1 * jax.random.normal(ks[1], (C,), jnp.float32)
    b1 = 0.1 * jax.random.normal(ks[2], (C,), jnp.float32)
    w1 = jax.random.normal(ks[3], (C, 128), jnp.float32) * math.sqrt(2.0 / C)
    s2 = 1.0 + 0.1 * jax.random.normal(ks[4], (128,), jnp.float32)
    b2 = 0.1 * jax.random.normal(ks[5], (128,), jnp.float32)
    w2 = jax.random.normal(ks[6], (3, 3, 128, 32), jnp.float32) * math.sqrt(2.0 / 1152)
    w1b, w2b = w1.astype(jnp.bfloat16), w2.astype(jnp.bfloat16)

    taps, mask = _conv3x3_taps(B, H, W)
    out = dense_layer_pallas(x4.reshape(B * H * W, C), s1.reshape(1, C),
                             b1.reshape(1, C), w1b, s2.reshape(1, 128),
                             b2.reshape(1, 128), w2b.reshape(9, 128, 32),
                             mask, taps=taps)
    ref = _dense_layer_reference(x4, s1, b1, w1b.astype(jnp.float32), s2, b2,
                                 w2b.astype(jnp.float32)).reshape(B * H * W, 32)
    err = float(jnp.linalg.norm(out - ref) / (jnp.linalg.norm(ref) + 1e-9))
    assert err < 0.03, f"fused dense-layer kernel mismatch (rel l2 err={err})"


# ============================================================================
if __name__ == "__main__":
    _check_dense_layer_kernel()

    key = jax.random.PRNGKey(0)
    class_num = 10
    params = build_params(key, class_num)

    # smallest spatial size that survives the 5 stride-2 stages of DenseNet-121
    x = jax.random.normal(jax.random.fold_in(key, 12345),
                          (2, 3, 32, 32), jnp.float32)            # NCHW, like PyTorch

    logits, f = ft_net_dense_forward(x, params)
    jax.block_until_ready((logits, f))

    assert logits.shape == (2, class_num)
    assert f.shape == (2, 512)
    assert bool(jnp.all(jnp.isfinite(logits))) and bool(jnp.all(jnp.isfinite(f)))
    # f rows are L2-normalized (up to the +1e-8 in the denominator)
    assert bool(jnp.all(jnp.abs(jnp.linalg.norm(f, axis=1) - 1.0) < 1e-3))
    print("KERNEL_OK")
</pallas_src>

<mosaic_0001>
module attributes {stable_mosaic.version = 11 : i64} {
  func.func @_dense_layer_kernel(%arg0: memref<32x64xf32, #tpu.memory_space<vmem>>, %arg1: memref<1x64xf32, #tpu.memory_space<vmem>>, %arg2: memref<1x64xf32, #tpu.memory_space<vmem>>, %arg3: memref<64x128xbf16, #tpu.memory_space<vmem>>, %arg4: memref<1x128xf32, #tpu.memory_space<vmem>>, %arg5: memref<1x128xf32, #tpu.memory_space<vmem>>, %arg6: memref<9x128x32xbf16, #tpu.memory_space<vmem>>, %arg7: memref<32x9xf32, #tpu.memory_space<vmem>>, %arg8: memref<32x32xf32, #tpu.memory_space<vmem>>) attributes {dimension_semantics = [], scalar_prefetch = 0 : i64, scratch_operands = 0 : i64, tpu.core_type = #tpu.core_type<tc>} {
    %c0 = arith.constant 0 : index
    %c0_0 = arith.constant 0 : index
    %0 = vector.load %arg0[%c0, %c0_0] : memref<32x64xf32, #tpu.memory_space<vmem>>, vector<32x64xf32>
    %c0_1 = arith.constant 0 : index
    %c0_2 = arith.constant 0 : index
    %1 = vector.load %arg1[%c0_1, %c0_2] : memref<1x64xf32, #tpu.memory_space<vmem>>, vector<1x64xf32>
    %2 = vector.broadcast %1 : vector<1x64xf32> to vector<32x64xf32>
    %3 = arith.mulf %0, %2 : vector<32x64xf32>
    %c0_3 = arith.constant 0 : index
    %c0_4 = arith.constant 0 : index
    %4 = vector.load %arg2[%c0_3, %c0_4] : memref<1x64xf32, #tpu.memory_space<vmem>>, vector<1x64xf32>
    %5 = vector.broadcast %4 : vector<1x64xf32> to vector<32x64xf32>
    %6 = arith.addf %3, %5 : vector<32x64xf32>
    %cst = arith.constant 0.000000e+00 : f32
    %7 = vector.broadcast %cst : f32 to vector<32x64xf32>
    %8 = arith.maximumf %6, %7 : vector<32x64xf32>
    %9 = arith.truncf %8 : vector<32x64xf32> to vector<32x64xbf16>
    %c0_5 = arith.constant 0 : index
    %c0_6 = arith.constant 0 : index
    %10 = vector.load %arg3[%c0_5, %c0_6] : memref<64x128xbf16, #tpu.memory_space<vmem>>, vector<64x128xbf16>
    %cst_7 = arith.constant dense<0.000000e+00> : vector<32x128xf32>
    %11 = tpu.matmul %9, %10, %cst_7 {dimension_numbers = #tpu.dot_dimension_numbers<[1], [0], [0], [1], [0, 0, 1, 1], [], []>} : vector<32x64xbf16>, vector<64x128xbf16>, vector<32x128xf32> -> vector<32x128xf32>
    %c0_8 = arith.constant 0 : index
    %c0_9 = arith.constant 0 : index
    %12 = vector.load %arg4[%c0_8, %c0_9] : memref<1x128xf32, #tpu.memory_space<vmem>>, vector<1x128xf32>
    %13 = vector.broadcast %12 : vector<1x128xf32> to vector<32x128xf32>
    %14 = arith.mulf %11, %13 : vector<32x128xf32>
    %c0_10 = arith.constant 0 : index
    %c0_11 = arith.constant 0 : index
    %15 = vector.load %arg5[%c0_10, %c0_11] : memref<1x128xf32, #tpu.memory_space<vmem>>, vector<1x128xf32>
    %16 = vector.broadcast %15 : vector<1x128xf32> to vector<32x128xf32>
    %17 = arith.addf %14, %16 : vector<32x128xf32>
    %cst_12 = arith.constant 0.000000e+00 : f32
    %18 = vector.broadcast %cst_12 : f32 to vector<32x128xf32>
    %19 = arith.maximumf %17, %18 : vector<32x128xf32>
    %cst_13 = arith.constant 0.000000e+00 : f32
    %20 = vector.broadcast %cst_13 : f32 to vector<5x128xf32>
    %21 = tpu.concatenate %20, %19, %20 in 0 : vector<5x128xf32>, vector<32x128xf32>, vector<5x128xf32> -> vector<42x128xf32>
    %cst_14 = arith.constant 0.000000e+00 : f32
    %22 = vector.broadcast %cst_14 : f32 to vector<32x32xf32>
    %23 = vector.extract_strided_slice %21 {offsets = [0, 0], sizes = [32, 128], strides = [1, 1]} : vector<42x128xf32> to vector<32x128xf32>
    %c0_15 = arith.constant 0 : index
    %c0_16 = arith.constant 0 : index
    %24 = vector.load %arg7[%c0_15, %c0_16] : memref<32x9xf32, #tpu.memory_space<vmem>>, vector<32x1xf32>
    %25 = vector.broadcast %24 : vector<32x1xf32> to vector<32x128xf32>
    %26 = arith.mulf %23, %25 : vector<32x128xf32>
    %27 = arith.truncf %26 : vector<32x128xf32> to vector<32x128xbf16>
    %c0_17 = arith.constant 0 : index
    %c0_18 = arith.constant 0 : index
    %c0_19 = arith.constant 0 : index
    %28 = vector.load %arg6[%c0_17, %c0_18, %c0_19] : memref<9x128x32xbf16, #tpu.memory_space<vmem>>, vector<1x128x32xbf16>
    %29 = vector.shape_cast %28 : vector<1x128x32xbf16> to vector<128x32xbf16>
    %cst_20 = arith.constant dense<0.000000e+00> : vector<32x32xf32>
    %30 = tpu.matmul %27, %29, %cst_20 {dimension_numbers = #tpu.dot_dimension_numbers<[1], [0], [0], [1], [0, 0, 1, 1], [], []>} : vector<32x128xbf16>, vector<128x32xbf16>, vector<32x32xf32> -> vector<32x32xf32>
    %31 = arith.addf %22, %30 : vector<32x32xf32>
    %32 = vector.extract_strided_slice %21 {offsets = [1, 0], sizes = [32, 128], strides = [1, 1]} : vector<42x128xf32> to vector<32x128xf32>
    %c0_21 = arith.constant 0 : index
    %c1 = arith.constant 1 : index
    %33 = vector.load %arg7[%c0_21, %c1] : memref<32x9xf32, #tpu.memory_space<vmem>>, vector<32x1xf32>
    %34 = vector.broadcast %33 : vector<32x1xf32> to vector<32x128xf32>
    %35 = arith.mulf %32, %34 : vector<32x128xf32>
    %36 = arith.truncf %35 : vector<32x128xf32> to vector<32x128xbf16>
    %c1_22 = arith.constant 1 : index
    %c0_23 = arith.constant 0 : index
    %c0_24 = arith.constant 0 : index
    %37 = vector.load %arg6[%c1_22, %c0_23, %c0_24] : memref<9x128x32xbf16, #tpu.memory_space<vmem>>, vector<1x128x32xbf16>
    %38 = vector.shape_cast %37 : vector<1x128x32xbf16> to vector<128x32xbf16>
    %cst_25 = arith.constant dense<0.000000e+00> : vector<32x32xf32>
    %39 = tpu.matmul %36, %38, %cst_25 {dimension_numbers = #tpu.dot_dimension_numbers<[1], [0], [0], [1], [0, 0, 1, 1], [], []>} : vector<32x128xbf16>, vector<128x32xbf16>, vector<32x32xf32> -> vector<32x32xf32>
    %40 = arith.addf %31, %39 : vector<32x32xf32>
    %41 = vector.extract_strided_slice %21 {offsets = [2, 0], sizes = [32, 128], strides = [1, 1]} : vector<42x128xf32> to vector<32x128xf32>
    %c0_26 = arith.constant 0 : index
    %c2 = arith.constant 2 : index
    %42 = vector.load %arg7[%c0_26, %c2] : memref<32x9xf32, #tpu.memory_space<vmem>>, vector<32x1xf32>
    %43 = vector.broadcast %42 : vector<32x1xf32> to vector<32x128xf32>
    %44 = arith.mulf %41, %43 : vector<32x128xf32>
    %45 = arith.truncf %44 : vector<32x128xf32> to vector<32x128xbf16>
    %c2_27 = arith.constant 2 : index
    %c0_28 = arith.constant 0 : index
    %c0_29 = arith.constant 0 : index
    %46 = vector.load %arg6[%c2_27, %c0_28, %c0_29] : memref<9x128x32xbf16, #tpu.memory_space<vmem>>, vector<1x128x32xbf16>
    %47 = vector.shape_cast %46 : vector<1x128x32xbf16> to vector<128x32xbf16>
    %cst_30 = arith.constant dense<0.000000e+00> : vector<32x32xf32>
    %48 = tpu.matmul %45, %47, %cst_30 {dimension_numbers = #tpu.dot_dimension_numbers<[1], [0], [0], [1], [0, 0, 1, 1], [], []>} : vector<32x128xbf16>, vector<128x32xbf16>, vector<32x32xf32> -> vector<32x32xf32>
    %49 = arith.addf %40, %48 : vector<32x32xf32>
    %50 = vector.extract_strided_slice %21 {offsets = [4, 0], sizes = [32, 128], strides = [1, 1]} : vector<42x128xf32> to vector<32x128xf32>
    %c0_31 = arith.constant 0 : index
    %c3 = arith.constant 3 : index
    %51 = vector.load %arg7[%c0_31, %c3] : memref<32x9xf32, #tpu.memory_space<vmem>>, vector<32x1xf32>
    %52 = vector.broadcast %51 : vector<32x1xf32> to vector<32x128xf32>
    %53 = arith.mulf %50, %52 : vector<32x128xf32>
    %54 = arith.truncf %53 : vector<32x128xf32> to vector<32x128xbf16>
    %c3_32 = arith.constant 3 : index
    %c0_33 = arith.constant 0 : index
    %c0_34 = arith.constant 0 : index
    %55 = vector.load %arg6[%c3_32, %c0_33, %c0_34] : memref<9x128x32xbf16, #tpu.memory_space<vmem>>, vector<1x128x32xbf16>
    %56 = vector.shape_cast %55 : vector<1x128x32xbf16> to vector<128x32xbf16>
    %cst_35 = arith.constant dense<0.000000e+00> : vector<32x32xf32>
    %57 = tpu.matmul %54, %56, %cst_35 {dimension_numbers = #tpu.dot_dimension_numbers<[1], [0], [0], [1], [0, 0, 1, 1], [], []>} : vector<32x128xbf16>, vector<128x32xbf16>, vector<32x32xf32> -> vector<32x32xf32>
    %58 = arith.addf %49, %57 : vector<32x32xf32>
    %59 = vector.extract_strided_slice %21 {offsets = [5, 0], sizes = [32, 128], strides = [1, 1]} : vector<42x128xf32> to vector<32x128xf32>
    %c0_36 = arith.constant 0 : index
    %c4 = arith.constant 4 : index
    %60 = vector.load %arg7[%c0_36, %c4] : memref<32x9xf32, #tpu.memory_space<vmem>>, vector<32x1xf32>
    %61 = vector.broadcast %60 : vector<32x1xf32> to vector<32x128xf32>
    %62 = arith.mulf %59, %61 : vector<32x128xf32>
    %63 = arith.truncf %62 : vector<32x128xf32> to vector<32x128xbf16>
    %c4_37 = arith.constant 4 : index
    %c0_38 = arith.constant 0 : index
    %c0_39 = arith.constant 0 : index
    %64 = vector.load %arg6[%c4_37, %c0_38, %c0_39] : memref<9x128x32xbf16, #tpu.memory_space<vmem>>, vector<1x128x32xbf16>
    %65 = vector.shape_cast %64 : vector<1x128x32xbf16> to vector<128x32xbf16>
    %cst_40 = arith.constant dense<0.000000e+00> : vector<32x32xf32>
    %66 = tpu.matmul %63, %65, %cst_40 {dimension_numbers = #tpu.dot_dimension_numbers<[1], [0], [0], [1], [0, 0, 1, 1], [], []>} : vector<32x128xbf16>, vector<128x32xbf16>, vector<32x32xf32> -> vector<32x32xf32>
    %67 = arith.addf %58, %66 : vector<32x32xf32>
    %68 = vector.extract_strided_slice %21 {offsets = [6, 0], sizes = [32, 128], strides = [1, 1]} : vector<42x128xf32> to vector<32x128xf32>
    %c0_41 = arith.constant 0 : index
    %c5 = arith.constant 5 : index
    %69 = vector.load %arg7[%c0_41, %c5] : memref<32x9xf32, #tpu.memory_space<vmem>>, vector<32x1xf32>
    %70 = vector.broadcast %69 : vector<32x1xf32> to vector<32x128xf32>
    %71 = arith.mulf %68, %70 : vector<32x128xf32>
    %72 = arith.truncf %71 : vector<32x128xf32> to vector<32x128xbf16>
    %c5_42 = arith.constant 5 : index
    %c0_43 = arith.constant 0 : index
    %c0_44 = arith.constant 0 : index
    %73 = vector.load %arg6[%c5_42, %c0_43, %c0_44] : memref<9x128x32xbf16, #tpu.memory_space<vmem>>, vector<1x128x32xbf16>
    %74 = vector.shape_cast %73 : vector<1x128x32xbf16> to vector<128x32xbf16>
    %cst_45 = arith.constant dense<0.000000e+00> : vector<32x32xf32>
    %75 = tpu.matmul %72, %74, %cst_45 {dimension_numbers = #tpu.dot_dimension_numbers<[1], [0], [0], [1], [0, 0, 1, 1], [], []>} : vector<32x128xbf16>, vector<128x32xbf16>, vector<32x32xf32> -> vector<32x32xf32>
    %76 = arith.addf %67, %75 : vector<32x32xf32>
    %77 = vector.extract_strided_slice %21 {offsets = [8, 0], sizes = [32, 128], strides = [1, 1]} : vector<42x128xf32> to vector<32x128xf32>
    %c0_46 = arith.constant 0 : index
    %c6 = arith.constant 6 : index
    %78 = vector.load %arg7[%c0_46, %c6] : memref<32x9xf32, #tpu.memory_space<vmem>>, vector<32x1xf32>
    %79 = vector.broadcast %78 : vector<32x1xf32> to vector<32x128xf32>
    %80 = arith.mulf %77, %79 : vector<32x128xf32>
    %81 = arith.truncf %80 : vector<32x128xf32> to vector<32x128xbf16>
    %c6_47 = arith.constant 6 : index
    %c0_48 = arith.constant 0 : index
    %c0_49 = arith.constant 0 : index
    %82 = vector.load %arg6[%c6_47, %c0_48, %c0_49] : memref<9x128x32xbf16, #tpu.memory_space<vmem>>, vector<1x128x32xbf16>
    %83 = vector.shape_cast %82 : vector<1x128x32xbf16> to vector<128x32xbf16>
    %cst_50 = arith.constant dense<0.000000e+00> : vector<32x32xf32>
    %84 = tpu.matmul %81, %83, %cst_50 {dimension_numbers = #tpu.dot_dimension_numbers<[1], [0], [0], [1], [0, 0, 1, 1], [], []>} : vector<32x128xbf16>, vector<128x32xbf16>, vector<32x32xf32> -> vector<32x32xf32>
    %85 = arith.addf %76, %84 : vector<32x32xf32>
    %86 = vector.extract_strided_slice %21 {offsets = [9, 0], sizes = [32, 128], strides = [1, 1]} : vector<42x128xf32> to vector<32x128xf32>
    %c0_51 = arith.constant 0 : index
    %c7 = arith.constant 7 : index
    %87 = vector.load %arg7[%c0_51, %c7] : memref<32x9xf32, #tpu.memory_space<vmem>>, vector<32x1xf32>
    %88 = vector.broadcast %87 : vector<32x1xf32> to vector<32x128xf32>
    %89 = arith.mulf %86, %88 : vector<32x128xf32>
    %90 = arith.truncf %89 : vector<32x128xf32> to vector<32x128xbf16>
    %c7_52 = arith.constant 7 : index
    %c0_53 = arith.constant 0 : index
    %c0_54 = arith.constant 0 : index
    %91 = vector.load %arg6[%c7_52, %c0_53, %c0_54] : memref<9x128x32xbf16, #tpu.memory_space<vmem>>, vector<1x128x32xbf16>
    %92 = vector.shape_cast %91 : vector<1x128x32xbf16> to vector<128x32xbf16>
    %cst_55 = arith.constant dense<0.000000e+00> : vector<32x32xf32>
    %93 = tpu.matmul %90, %92, %cst_55 {dimension_numbers = #tpu.dot_dimension_numbers<[1], [0], [0], [1], [0, 0, 1, 1], [], []>} : vector<32x128xbf16>, vector<128x32xbf16>, vector<32x32xf32> -> vector<32x32xf32>
    %94 = arith.addf %85, %93 : vector<32x32xf32>
    %95 = vector.extract_strided_slice %21 {offsets = [10, 0], sizes = [32, 128], strides = [1, 1]} : vector<42x128xf32> to vector<32x128xf32>
    %c0_56 = arith.constant 0 : index
    %c8 = arith.constant 8 : index
    %96 = vector.load %arg7[%c0_56, %c8] : memref<32x9xf32, #tpu.memory_space<vmem>>, vector<32x1xf32>
    %97 = vector.broadcast %96 : vector<32x1xf32> to vector<32x128xf32>
    %98 = arith.mulf %95, %97 : vector<32x128xf32>
    %99 = arith.truncf %98 : vector<32x128xf32> to vector<32x128xbf16>
    %c8_57 = arith.constant 8 : index
    %c0_58 = arith.constant 0 : index
    %c0_59 = arith.constant 0 : index
    %100 = vector.load %arg6[%c8_57, %c0_58, %c0_59] : memref<9x128x32xbf16, #tpu.memory_space<vmem>>, vector<1x128x32xbf16>
    %101 = vector.shape_cast %100 : vector<1x128x32xbf16> to vector<128x32xbf16>
    %cst_60 = arith.constant dense<0.000000e+00> : vector<32x32xf32>
    %102 = tpu.matmul %99, %101, %cst_60 {dimension_numbers = #tpu.dot_dimension_numbers<[1], [0], [0], [1], [0, 0, 1, 1], [], []>} : vector<32x128xbf16>, vector<128x32xbf16>, vector<32x32xf32> -> vector<32x32xf32>
    %103 = arith.addf %94, %102 : vector<32x32xf32>
    %c0_61 = arith.constant 0 : index
    %c0_62 = arith.constant 0 : index
    %104 = vector.load %arg8[%c0_61, %c0_62] : memref<32x32xf32, #tpu.memory_space<vmem>>, vector<32x32xf32>
    tpu.vector_store %arg8[%c0_61, %c0_62], %103 {strides = array<i32>} : memref<32x32xf32, #tpu.memory_space<vmem>>, vector<32x32xf32>,
    return
  }
}

</mosaic_0001>

<llo_original>
// kernel: dense_layer_pallas.1
$region0: #{dense_layer_pallas.1}
  #allocation0 [shape = 'u32[]', space=smem, size = 0x4, offset = 0x4, fixed_abs, tag = 'smem constant byte address 0x4 - core index']
  #allocation1 [shape = 'u32[72,128]{1,0:T(1,128)}', space=vmem, size = 0x9000, scoped, tag = 'internal scratch']
  %s0 = inlined_call_operand.vmem [shape: f32[32,64], index: 0, kind: input, shape index: {}]
  %s1 = inlined_call_operand.vmem [shape: f32[1,64], index: 1, kind: input, shape index: {}]
  %s2 = inlined_call_operand.vmem [shape: f32[1,64], index: 2, kind: input, shape index: {}]
  %s3 = inlined_call_operand.vmem [shape: bf16[64,128], index: 3, kind: input, shape index: {}]
  %s4 = inlined_call_operand.vmem [shape: f32[1,128], index: 4, kind: input, shape index: {}]
  %s5 = inlined_call_operand.vmem [shape: f32[1,128], index: 5, kind: input, shape index: {}]
  %s6 = inlined_call_operand.vmem [shape: bf16[9,128,32], index: 6, kind: input, shape index: {}]
  %s7 = inlined_call_operand.vmem [shape: f32[32,9], index: 7, kind: input, shape index: {}]
  %s8 = inlined_call_operand.hbm [shape: f32[32,32], index: 8, kind: output, shape index: {}]
  %s9 = sld [smem:[#allocation0]]
  $region42: #{dense_layer_pallas.1} parent=0
    _
  %s11 = ssub.s32 1, %s9
  %s12 = scalar_select 0, %s11, %s9
  $region1: #{dense_layer_pallas.1} parent=0
    #allocation2 [shape = 'u8[16384]{0}', space=vmem, size = 0x4000, scoped, tag = 'output window, operand 0, single buffered']
    #allocation3 [shape = 's32[1]{0}', space=sflag, size = 0x4, scoped, tag = 'scoped memory for dense_layer_pallas.1']
    %13 = vsyncpa [#allocation3], 0
    // Predicated region
    $region2: #{dense_layer_pallas.1} parent=1 // pred_check
      _
    $region3: #{dense_layer_pallas.1} parent=1 // pred_check_branch
      %15 = sbr.rel (0) target = $region5
    $region4: #{dense_layer_pallas.1} parent=1 // pred_region
      _
    $region5: #{dense_layer_pallas.1} parent=1 // pred_fallthru
      _
    // Predicated region
    $region6: #{dense_layer_pallas.1} parent=1 // pred_check
      _
    $region7: #{dense_layer_pallas.1} parent=1 // pred_check_branch
      %17 = sbr.rel (0) target = $region9
    $region8: #{dense_layer_pallas.1} parent=1 // pred_region
      _
    $region9: #{dense_layer_pallas.1} parent=1 // pred_fallthru
      _
    // Predicated region
    $region10: #{dense_layer_pallas.1} parent=1 // pred_check
      _
    $region11: #{dense_layer_pallas.1} parent=1 // pred_check_branch
      %19 = sbr.rel (0) target = $region13
    $region12: #{dense_layer_pallas.1} parent=1 // pred_region
      _
    $region13: #{dense_layer_pallas.1} parent=1 // pred_fallthru
      _
    // Predicated region
    $region14: #{dense_layer_pallas.1} parent=1 // pred_check
      _
    $region15: #{dense_layer_pallas.1} parent=1 // pred_check_branch
      %21 = sbr.rel (0) target = $region17
    $region16: #{dense_layer_pallas.1} parent=1 // pred_region
      _
    $region17: #{dense_layer_pallas.1} parent=1 // pred_fallthru
      _
    // Predicated region
    $region18: #{dense_layer_pallas.1} parent=1 // pred_check
      _
    $region19: #{dense_layer_pallas.1} parent=1 // pred_check_branch
      %23 = sbr.rel (0) target = $region21
    $region20: #{dense_layer_pallas.1} parent=1 // pred_region
      _
    $region21: #{dense_layer_pallas.1} parent=1 // pred_fallthru
      _
    // Predicated region
    $region22: #{dense_layer_pallas.1} parent=1 // pred_check
      _
    $region23: #{dense_layer_pallas.1} parent=1 // pred_check_branch
      %25 = sbr.rel (0) target = $region25
    $region24: #{dense_layer_pallas.1} parent=1 // pred_region
      _
    $region25: #{dense_layer_pallas.1} parent=1 // pred_fallthru
      _
    // Predicated region
    $region26: #{dense_layer_pallas.1} parent=1 // pred_check
      _
    $region27: #{dense_layer_pallas.1} parent=1 // pred_check_branch
      %27 = sbr.rel (0) target = $region29
    $region28: #{dense_layer_pallas.1} parent=1 // pred_region
      _
    $region29: #{dense_layer_pallas.1} parent=1 // pred_fallthru
      _
    // Predicated region
    $region30: #{dense_layer_pallas.1} parent=1 // pred_check
      _
    $region31: #{dense_layer_pallas.1} parent=1 // pred_check_branch
      %29 = sbr.rel (0) target = $region33
    $region32: #{dense_layer_pallas.1} parent=1 // pred_region
      _
    $region33: #{dense_layer_pallas.1} parent=1 // pred_fallthru
      _
    %v31 = vld [vmem:[%s0] sm:$0xff]
    %v32 = vld [vmem:[%s0 + $0x8] sm:$0xff]
    %v33 = vld [vmem:[%s0 + $0x10] sm:$0xff]
    %v34 = vld [vmem:[%s0 + $0x18] sm:$0xff]
    %v35 = vld [vmem:[%s1] sm:$0x1]
    %v37 = vperm.slane %v35, 0
    %v39 = vmul.f32 %v31, %v37
    %v40 = vmul.f32 %v32, %v37
    %v41 = vmul.f32 %v33, %v37
    %v42 = vmul.f32 %v34, %v37
    %v43 = vld [vmem:[%s2] sm:$0x1]
    %v45 = vperm.slane %v43, 0
    %v47 = vadd.f32 %v39, %v45
    %v48 = vadd.f32 %v40, %v45
    %v49 = vadd.f32 %v41, %v45
    %v50 = vadd.f32 %v42, %v45
    %v51 = vmax.f32 %v47, 0.0
    %v52 = vmax.f32 %v48, 0.0
    %v53 = vmax.f32 %v49, 0.0
    %v54 = vmax.f32 %v50, 0.0
    %v55 = vpack.c.bf16 %v52, %v51
    %v56 = vpack.c.bf16 %v54, %v53
    %v57 = vld [vmem:[%s3] sm:$0xf]
    %v58 = vld [vmem:[%s3 + $0x4] sm:$0xf]
    %v59 = vld [vmem:[%s3 + $0x8] sm:$0xf]
    %v60 = vld [vmem:[%s3 + $0xc] sm:$0xf]
    %v61 = vld [vmem:[%s3 + $0x10] sm:$0xf]
    %v62 = vld [vmem:[%s3 + $0x14] sm:$0xf]
    %v63 = vld [vmem:[%s3 + $0x18] sm:$0xf]
    %v64 = vld [vmem:[%s3 + $0x1c] sm:$0xf]
    %v73 = vunpack.c.l.b16 %v57
    %v74 = vunpack.c.l.b16 %v58
    %v75 = vunpack.c.l.b16 %v59
    %v76 = vunpack.c.l.b16 %v60
    %v77 = vunpack.c.l.b16 %v61
    %v78 = vunpack.c.l.b16 %v62
    %v79 = vunpack.c.l.b16 %v63
    %v80 = vunpack.c.l.b16 %v64
    %v81 = vpack.c.b16 %v74, %v73
    %v82 = vpack.c.b16 %v76, %v75
    %v83 = vpack.c.b16 %v78, %v77
    %v84 = vpack.c.b16 %v80, %v79
    %vm89 = vcmask 523264
    %v91 = vsel %vm89, %v55, 0
    %v94 = vsel %vm89, %v56, 0
    %96 = vmatpush.bf16.msra.mxu0 0
    %97 = vmatpush.bf16.msra.mxu0 0
    %98 = vmatpush.bf16.msra.mxu0 0
    %99 = vmatpush.bf16.msra.mxu0 0
    %100 = vmatpush.bf16.msra.mxu0 %v84
    %101 = vmatpush.bf16.msra.mxu0 %v83
    %102 = vmatpush.bf16.msra.mxu0 %v82
    %103 = vmatpush.bf16.msra.mxu0 %v81
    %104 = vmatmul.bf16.gmra.mxu0 %v91
    %v105 = vpop.f32.mrf.mxu0
    %v106 = vadd.f32 0.0, %v105
    %v107 = vpop.f32.mrf.mxu0
    %v108 = vadd.f32 0.0, %v107
    %109 = vmatmul.bf16.gmra.mxu0 %v94
    %v110 = vpop.f32.mrf.mxu0
    %v111 = vadd.f32 0.0, %v110
    %v112 = vpop.f32.mrf.mxu0
    %v113 = vadd.f32 0.0, %v112
    %114 = vdwg.mxu0
    %v115 = vld [vmem:[%s4] sm:$0x1]
    %v117 = vperm.slane %v115, 0
    %v119 = vmul.f32 %v106, %v117
    %v120 = vmul.f32 %v108, %v117
    %v121 = vmul.f32 %v111, %v117
    %v122 = vmul.f32 %v113, %v117
    %v123 = vld [vmem:[%s5] sm:$0x1]
    %v125 = vperm.slane %v123, 0
    %v127 = vadd.f32 %v119, %v125
    %v128 = vadd.f32 %v120, %v125
    %v129 = vadd.f32 %v121, %v125
    %v130 = vadd.f32 %v122, %v125
    %v131 = vmax.f32 %v127, 0.0
    %v132 = vmax.f32 %v128, 0.0
    %v133 = vmax.f32 %v129, 0.0
    %v134 = vmax.f32 %v130, 0.0
    %vm139 = vcmask 1044480
    %v140 = vrot.slane %v131, 3
    %v141 = vrot.slane %v132, 3
    %v142 = vsel %vm139, %v140, %v141
    %v143 = vrot.slane %v133, 3
    %v144 = vsel %vm139, %v141, %v143
    %v145 = vrot.slane %v134, 3
    %v146 = vsel %vm139, %v143, %v145
    %v152 = vsel %vm139, 0.0, %v140
    %v153 = vsel %vm139, %v145, 0.0
    %v154 = vld [vmem:[%s7] sm:$0xff]
    %v155 = vld [vmem:[%s7 + $0x8] sm:$0xff]
    %v156 = vld [vmem:[%s7 + $0x10] sm:$0xff]
    %v157 = vld [vmem:[%s7 + $0x18] sm:$0xff]
    %159 = vset.pattern.permute.xlu0 0
    %160 = vperm.xlu0 %159, %v154
    %v161 = vpop.permute.xlu0 %160
    %164 = vset.pattern.permute.xlu0 0
    %165 = vperm.xlu0 %164, %v155
    %v166 = vpop.permute.xlu0 %165
    %169 = vset.pattern.permute.xlu0 0
    %170 = vperm.xlu0 %169, %v156
    %v171 = vpop.permute.xlu0 %170
    %174 = vset.pattern.permute.xlu0 0
    %175 = vperm.xlu0 %174, %v157
    %v176 = vpop.permute.xlu0 %175
    %v178 = vmul.f32 %v152, %v161
    %v179 = vmul.f32 %v142, %v166
    %v180 = vmul.f32 %v144, %v171
    %v181 = vmul.f32 %v146, %v176
    %v182 = vpack.c.bf16 %v179, %v178
    %v183 = vpack.c.bf16 %v181, %v180
    %v184 = vld [vmem:[%s6] sm:$0xf]
    %v185 = vld [vmem:[%s6 + $0x4] sm:$0xf]
    %v186 = vld [vmem:[%s6 + $0x8] sm:$0xf]
    %v187 = vld [vmem:[%s6 + $0xc] sm:$0xf]
    %v188 = vld [vmem:[%s6 + $0x10] sm:$0xf]
    %v189 = vld [vmem:[%s6 + $0x14] sm:$0xf]
    %v190 = vld [vmem:[%s6 + $0x18] sm:$0xf]
    %v191 = vld [vmem:[%s6 + $0x1c] sm:$0xf]
    %v192 = vld [vmem:[%s6 + $0x20] sm:$0xf]
    %v193 = vld [vmem:[%s6 + $0x24] sm:$0xf]
    %v194 = vld [vmem:[%s6 + $0x28] sm:$0xf]
    %v195 = vld [vmem:[%s6 + $0x2c] sm:$0xf]
    %v196 = vld [vmem:[%s6 + $0x30] sm:$0xf]
    %v197 = vld [vmem:[%s6 + $0x34] sm:$0xf]
    %v198 = vld [vmem:[%s6 + $0x38] sm:$0xf]
    %v199 = vld [vmem:[%s6 + $0x3c] sm:$0xf]
    %200 = vset.pattern.permute.xlu0 1
    %201 = vperm.xlu0 %200, %v154
    %v202 = vpop.permute.xlu0 %201
    %203 = vset.pattern.permute.xlu0 1
    %204 = vperm.xlu0 %203, %v155
    %v205 = vpop.permute.xlu0 %204
    %206 = vset.pattern.permute.xlu0 1
    %207 = vperm.xlu0 %206, %v156
    %v208 = vpop.permute.xlu0 %207
    %209 = vset.pattern.permute.xlu0 1
    %210 = vperm.xlu0 %209, %v157
    %v211 = vpop.permute.xlu0 %210
    %vm212 = vcmask 1040384
    %v213 = vrot.slane %v202, 7
    %v214 = vrot.slane %v205, 7
    %v215 = vsel %vm212, %v213, %v214
    %v216 = vrot.slane %v208, 7
    %v217 = vsel %vm212, %v214, %v216
    %v218 = vrot.slane %v211, 7
    %v219 = vsel %vm212, %v216, %v218
    %v225 = vmul.f32 %v152, %v213
    %v226 = vmul.f32 %v142, %v215
    %v227 = vmul.f32 %v144, %v217
    %v228 = vmul.f32 %v146, %v219
    %v229 = vmul.f32 %v153, %v218
    %v230 = vpack.c.bf16 %v226, %v225
    %v231 = vpack.c.bf16 %v228, %v227
    %v232 = vpack.c.bf16 %v229, %v229
    %s233 = scalar_lea.vmem %s6, 64
    %v234 = vld [vmem:[%s233] sm:$0xf]
    %v235 = vld [vmem:[%s233 + $0x4] sm:$0xf]
    %v236 = vld [vmem:[%s233 + $0x8] sm:$0xf]
    %v237 = vld [vmem:[%s233 + $0xc] sm:$0xf]
    %v238 = vld [vmem:[%s233 + $0x10] sm:$0xf]
    %v239 = vld [vmem:[%s233 + $0x14] sm:$0xf]
    %v240 = vld [vmem:[%s233 + $0x18] sm:$0xf]
    %v241 = vld [vmem:[%s233 + $0x1c] sm:$0xf]
    %v242 = vld [vmem:[%s233 + $0x20] sm:$0xf]
    %v243 = vld [vmem:[%s233 + $0x24] sm:$0xf]
    %v244 = vld [vmem:[%s233 + $0x28] sm:$0xf]
    %v245 = vld [vmem:[%s233 + $0x2c] sm:$0xf]
    %v246 = vld [vmem:[%s233 + $0x30] sm:$0xf]
    %v247 = vld [vmem:[%s233 + $0x34] sm:$0xf]
    %v248 = vld [vmem:[%s233 + $0x38] sm:$0xf]
    %v249 = vld [vmem:[%s233 + $0x3c] sm:$0xf]
    %vm250 = vsmask.f32 7424
    %v252 = vshrl.u32 %v230, 16
    %v254 = vshll.u32 %v230, 16
    %v256 = vrot.slane %v254, 1
    %v257 = vor.u32 %v252, %v256
    %v259 = vshll.u32 %v231, 16
    %v261 = vrot.slane %v259, 1
    %v262 = vsel %vm250, %v257, %v261
    %v263 = vshrl.u32 %v231, 16
    %v265 = vor.u32 %v263, %v261
    %v267 = vshll.u32 %v232, 16
    %v269 = vrot.slane %v267, 1
    %v270 = vsel %vm250, %v265, %v269
    %v289 = vunpack.c.l.b16 %v234
    %v290 = vunpack.c.l.b16 %v235
    %v291 = vunpack.c.l.b16 %v236
    %v292 = vunpack.c.l.b16 %v237
    %v293 = vunpack.c.l.b16 %v238
    %v294 = vunpack.c.l.b16 %v239
    %v295 = vunpack.c.l.b16 %v240
    %v296 = vunpack.c.l.b16 %v241
    %v297 = vunpack.c.l.b16 %v242
    %v298 = vunpack.c.l.b16 %v243
    %v299 = vunpack.c.l.b16 %v244
    %v300 = vunpack.c.l.b16 %v245
    %v301 = vunpack.c.l.b16 %v246
    %v302 = vunpack.c.l.b16 %v247
    %v303 = vunpack.c.l.b16 %v248
    %v304 = vunpack.c.l.b16 %v249
    %v305 = vpack.c.b16 %v290, %v289
    %v306 = vpack.c.b16 %v292, %v291
    %v307 = vpack.c.b16 %v294, %v293
    %v308 = vpack.c.b16 %v296, %v295
    %v309 = vpack.c.b16 %v298, %v297
    %v310 = vpack.c.b16 %v300, %v299
    %v311 = vpack.c.b16 %v302, %v301
    %v312 = vpack.c.b16 %v304, %v303
    %321 = vmatpush.bf16.msra.mxu0 %v312
    %322 = vmatpush.bf16.msra.mxu0 %v311
    %323 = vmatpush.bf16.msra.mxu0 %v310
    %324 = vmatpush.bf16.msra.mxu0 %v309
    %325 = vmatpush.bf16.msra.mxu0 %v308
    %326 = vmatpush.bf16.msra.mxu0 %v307
    %327 = vmatpush.bf16.msra.mxu0 %v306
    %328 = vmatpush.bf16.msra.mxu0 %v305
    %329 = vmatmul.bf16.gmra.mxu0 %v262
    %v330 = vpop.f32.mrf.mxu0
    %v331 = vadd.f32 0.0, %v330
    %v332 = vpop.f32.mrf.mxu0
    %v333 = vadd.f32 0.0, %v332
    %334 = vmatmul.bf16.gmra.mxu0 %v270
    %v335 = vpop.f32.mrf.mxu0
    %v336 = vadd.f32 0.0, %v335
    %v337 = vpop.f32.mrf.mxu0
    %v338 = vadd.f32 0.0, %v337
    %339 = vdwg.mxu0
    %v356 = vunpack.c.l.b16 %v184
    %v357 = vunpack.c.l.b16 %v185
    %v358 = vunpack.c.l.b16 %v186
    %v359 = vunpack.c.l.b16 %v187
    %v360 = vunpack.c.l.b16 %v188
    %v361 = vunpack.c.l.b16 %v189
    %v362 = vunpack.c.l.b16 %v190
    %v363 = vunpack.c.l.b16 %v191
    %v364 = vunpack.c.l.b16 %v192
    %v365 = vunpack.c.l.b16 %v193
    %v366 = vunpack.c.l.b16 %v194
    %v367 = vunpack.c.l.b16 %v195
    %v368 = vunpack.c.l.b16 %v196
    %v369 = vunpack.c.l.b16 %v197
    %v370 = vunpack.c.l.b16 %v198
    %v371 = vunpack.c.l.b16 %v199
    %v372 = vpack.c.b16 %v357, %v356
    %v373 = vpack.c.b16 %v359, %v358
    %v374 = vpack.c.b16 %v361, %v360
    %v375 = vpack.c.b16 %v363, %v362
    %v376 = vpack.c.b16 %v365, %v364
    %v377 = vpack.c.b16 %v367, %v366
    %v378 = vpack.c.b16 %v369, %v368
    %v379 = vpack.c.b16 %v371, %v370
    %388 = vmatpush.bf16.msra.mxu0 %v379
    %389 = vmatpush.bf16.msra.mxu0 %v378
    %390 = vmatpush.bf16.msra.mxu0 %v377
    %391 = vmatpush.bf16.msra.mxu0 %v376
    %392 = vmatpush.bf16.msra.mxu0 %v375
    %393 = vmatpush.bf16.msra.mxu0 %v374
    %394 = vmatpush.bf16.msra.mxu0 %v373
    %395 = vmatpush.bf16.msra.mxu0 %v372
    %396 = vmatmul.bf16.gmra.mxu0 %v182
    %v397 = vpop.f32.mrf.mxu0
    %v398 = vadd.f32 %v331, %v397
    %v399 = vpop.f32.mrf.mxu0
    %v400 = vadd.f32 %v333, %v399
    %401 = vmatmul.bf16.gmra.mxu0 %v183
    %v402 = vpop.f32.mrf.mxu0
    %v403 = vadd.f32 %v336, %v402
    %v404 = vpop.f32.mrf.mxu0
    %v405 = vadd.f32 %v338, %v404
    %406 = vdwg.mxu0
    %407 = vset.pattern.permute.xlu0 2
    %408 = vperm.xlu0 %407, %v154
    %v409 = vpop.permute.xlu0 %408
    %410 = vset.pattern.permute.xlu0 2
    %411 = vperm.xlu0 %410, %v155
    %v412 = vpop.permute.xlu0 %411
    %413 = vset.pattern.permute.xlu0 2
    %414 = vperm.xlu0 %413, %v156
    %v415 = vpop.permute.xlu0 %414
    %416 = vset.pattern.permute.xlu0 2
    %417 = vperm.xlu0 %416, %v157
    %v418 = vpop.permute.xlu0 %417
    %vm419 = vcmask 1041408
    %v420 = vrot.slane %v409, 6
    %v421 = vrot.slane %v412, 6
    %v422 = vsel %vm419, %v420, %v421
    %v423 = vrot.slane %v415, 6
    %v424 = vsel %vm419, %v421, %v423
    %v425 = vrot.slane %v418, 6
    %v426 = vsel %vm419, %v423, %v425
    %v432 = vmul.f32 %v152, %v420
    %v433 = vmul.f32 %v142, %v422
    %v434 = vmul.f32 %v144, %v424
    %v435 = vmul.f32 %v146, %v426
    %v436 = vmul.f32 %v153, %v425
    %v437 = vpack.c.bf16 %v433, %v432
    %v438 = vpack.c.bf16 %v435, %v434
    %v439 = vpack.c.bf16 %v436, %v436
    %s440 = scalar_lea.vmem %s6, 128
    %v441 = vld [vmem:[%s440] sm:$0xf]
    %v442 = vld [vmem:[%s440 + $0x4] sm:$0xf]
    %v443 = vld [vmem:[%s440 + $0x8] sm:$0xf]
    %v444 = vld [vmem:[%s440 + $0xc] sm:$0xf]
    %v445 = vld [vmem:[%s440 + $0x10] sm:$0xf]
    %v446 = vld [vmem:[%s440 + $0x14] sm:$0xf]
    %v447 = vld [vmem:[%s440 + $0x18] sm:$0xf]
    %v448 = vld [vmem:[%s440 + $0x1c] sm:$0xf]
    %v449 = vld [vmem:[%s440 + $0x20] sm:$0xf]
    %v450 = vld [vmem:[%s440 + $0x24] sm:$0xf]
    %v451 = vld [vmem:[%s440 + $0x28] sm:$0xf]
    %v452 = vld [vmem:[%s440 + $0x2c] sm:$0xf]
    %v453 = vld [vmem:[%s440 + $0x30] sm:$0xf]
    %v454 = vld [vmem:[%s440 + $0x34] sm:$0xf]
    %v455 = vld [vmem:[%s440 + $0x38] sm:$0xf]
    %v456 = vld [vmem:[%s440 + $0x3c] sm:$0xf]
    %vm460 = vcmask 1046528
    %v461 = vrot.slane %v437, 1
    %v462 = vrot.slane %v438, 1
    %v463 = vsel %vm460, %v461, %v462
    %v464 = vrot.slane %v439, 1
    %v465 = vsel %vm460, %v462, %v464
    %v484 = vunpack.c.l.b16 %v441
    %v485 = vunpack.c.l.b16 %v442
    %v486 = vunpack.c.l.b16 %v443
    %v487 = vunpack.c.l.b16 %v444
    %v488 = vunpack.c.l.b16 %v445
    %v489 = vunpack.c.l.b16 %v446
    %v490 = vunpack.c.l.b16 %v447
    %v491 = vunpack.c.l.b16 %v448
    %v492 = vunpack.c.l.b16 %v449
    %v493 = vunpack.c.l.b16 %v450
    %v494 = vunpack.c.l.b16 %v451
    %v495 = vunpack.c.l.b16 %v452
    %v496 = vunpack.c.l.b16 %v453
    %v497 = vunpack.c.l.b16 %v454
    %v498 = vunpack.c.l.b16 %v455
    %v499 = vunpack.c.l.b16 %v456
    %v500 = vpack.c.b16 %v485, %v484
    %v501 = vpack.c.b16 %v487, %v486
    %v502 = vpack.c.b16 %v489, %v488
    %v503 = vpack.c.b16 %v491, %v490
    %v504 = vpack.c.b16 %v493, %v492
    %v505 = vpack.c.b16 %v495, %v494
    %v506 = vpack.c.b16 %v497, %v496
    %v507 = vpack.c.b16 %v499, %v498
    %516 = vmatpush.bf16.msra.mxu0 %v507
    %517 = vmatpush.bf16.msra.mxu0 %v506
    %518 = vmatpush.bf16.msra.mxu0 %v505
    %519 = vmatpush.bf16.msra.mxu0 %v504
    %520 = vmatpush.bf16.msra.mxu0 %v503
    %521 = vmatpush.bf16.msra.mxu0 %v502
    %522 = vmatpush.bf16.msra.mxu0 %v501
    %523 = vmatpush.bf16.msra.mxu0 %v500
    %524 = vmatmul.bf16.gmra.mxu0 %v463
    %v525 = vpop.f32.mrf.mxu0
    %v526 = vadd.f32 0.0, %v525
    %v527 = vpop.f32.mrf.mxu0
    %v528 = vadd.f32 0.0, %v527
    %529 = vmatmul.bf16.gmra.mxu0 %v465
    %v530 = vpop.f32.mrf.mxu0
    %v531 = vadd.f32 0.0, %v530
    %v532 = vpop.f32.mrf.mxu0
    %v533 = vadd.f32 0.0, %v532
    %534 = vdwg.mxu0
    %v535 = vadd.f32 %v398, %v526
    %v536 = vadd.f32 %v400, %v528
    %v537 = vadd.f32 %v403, %v531
    %v538 = vadd.f32 %v405, %v533
    %539 = vset.pattern.permute.xlu0 3
    %540 = vperm.xlu0 %539, %v154
    %v541 = vpop.permute.xlu0 %540
    %542 = vset.pattern.permute.xlu0 3
    %543 = vperm.xlu0 %542, %v155
    %v544 = vpop.permute.xlu0 %543
    %545 = vset.pattern.permute.xlu0 3
    %546 = vperm.xlu0 %545, %v156
    %v547 = vpop.permute.xlu0 %546
    %548 = vset.pattern.permute.xlu0 3
    %549 = vperm.xlu0 %548, %v157
    %v550 = vpop.permute.xlu0 %549
    %vm551 = vcmask 1043456
    %v552 = vrot.slane %v541, 4
    %v553 = vrot.slane %v544, 4
    %v554 = vsel %vm551, %v552, %v553
    %v555 = vrot.slane %v547, 4
    %v556 = vsel %vm551, %v553, %v555
    %v557 = vrot.slane %v550, 4
    %v558 = vsel %vm551, %v555, %v557
    %v564 = vmul.f32 %v152, %v552
    %v565 = vmul.f32 %v142, %v554
    %v566 = vmul.f32 %v144, %v556
    %v567 = vmul.f32 %v146, %v558
    %v568 = vmul.f32 %v153, %v557
    %v569 = vpack.c.bf16 %v565, %v564
    %v570 = vpack.c.bf16 %v567, %v566
    %v571 = vpack.c.bf16 %v568, %v568
    %s572 = scalar_lea.vmem %s6, 192
    %v573 = vld [vmem:[%s572] sm:$0xf]
    %v574 = vld [vmem:[%s572 + $0x4] sm:$0xf]
    %v575 = vld [vmem:[%s572 + $0x8] sm:$0xf]
    %v576 = vld [vmem:[%s572 + $0xc] sm:$0xf]
    %v577 = vld [vmem:[%s572 + $0x10] sm:$0xf]
    %v578 = vld [vmem:[%s572 + $0x14] sm:$0xf]
    %v579 = vld [vmem:[%s572 + $0x18] sm:$0xf]
    %v580 = vld [vmem:[%s572 + $0x1c] sm:$0xf]
    %v581 = vld [vmem:[%s572 + $0x20] sm:$0xf]
    %v582 = vld [vmem:[%s572 + $0x24] sm:$0xf]
    %v583 = vld [vmem:[%s572 + $0x28] sm:$0xf]
    %v584 = vld [vmem:[%s572 + $0x2c] sm:$0xf]
    %v585 = vld [vmem:[%s572 + $0x30] sm:$0xf]
    %v586 = vld [vmem:[%s572 + $0x34] sm:$0xf]
    %v587 = vld [vmem:[%s572 + $0x38] sm:$0xf]
    %v588 = vld [vmem:[%s572 + $0x3c] sm:$0xf]
    %vm592 = vcmask 1045504
    %v593 = vrot.slane %v569, 2
    %v594 = vrot.slane %v570, 2
    %v595 = vsel %vm592, %v593, %v594
    %v596 = vrot.slane %v571, 2
    %v597 = vsel %vm592, %v594, %v596
    %v616 = vunpack.c.l.b16 %v573
    %v617 = vunpack.c.l.b16 %v574
    %v618 = vunpack.c.l.b16 %v575
    %v619 = vunpack.c.l.b16 %v576
    %v620 = vunpack.c.l.b16 %v577
    %v621 = vunpack.c.l.b16 %v578
    %v622 = vunpack.c.l.b16 %v579
    %v623 = vunpack.c.l.b16 %v580
    %v624 = vunpack.c.l.b16 %v581
    %v625 = vunpack.c.l.b16 %v582
    %v626 = vunpack.c.l.b16 %v583
    %v627 = vunpack.c.l.b16 %v584
    %v628 = vunpack.c.l.b16 %v585
    %v629 = vunpack.c.l.b16 %v586
    %v630 = vunpack.c.l.b16 %v587
    %v631 = vunpack.c.l.b16 %v588
    %v632 = vpack.c.b16 %v617, %v616
    %v633 = vpack.c.b16 %v619, %v618
    %v634 = vpack.c.b16 %v621, %v620
    %v635 = vpack.c.b16 %v623, %v622
    %v636 = vpack.c.b16 %v625, %v624
    %v637 = vpack.c.b16 %v627, %v626
    %v638 = vpack.c.b16 %v629, %v628
    %v639 = vpack.c.b16 %v631, %v630
    %648 = vmatpush.bf16.msra.mxu0 %v639
    %649 = vmatpush.bf16.msra.mxu0 %v638
    %650 = vmatpush.bf16.msra.mxu0 %v637
    %651 = vmatpush.bf16.msra.mxu0 %v636
    %652 = vmatpush.bf16.msra.mxu0 %v635
    %653 = vmatpush.bf16.msra.mxu0 %v634
    %654 = vmatpush.bf16.msra.mxu0 %v633
    %655 = vmatpush.bf16.msra.mxu0 %v632
    %656 = vmatmul.bf16.gmra.mxu0 %v595
    %v657 = vpop.f32.mrf.mxu0
    %v658 = vadd.f32 0.0, %v657
    %v659 = vpop.f32.mrf.mxu0
    %v660 = vadd.f32 0.0, %v659
    %661 = vmatmul.bf16.gmra.mxu0 %v597
    %v662 = vpop.f32.mrf.mxu0
    %v663 = vadd.f32 0.0, %v662
    %v664 = vpop.f32.mrf.mxu0
    %v665 = vadd.f32 0.0, %v664
    %666 = vdwg.mxu0
    %v667 = vadd.f32 %v535, %v658
    %v668 = vadd.f32 %v536, %v660
    %v669 = vadd.f32 %v537, %v663
    %v670 = vadd.f32 %v538, %v665
    %671 = vset.pattern.permute.xlu0 4
    %672 = vperm.xlu0 %671, %v154
    %v673 = vpop.permute.xlu0 %672
    %674 = vset.pattern.permute.xlu0 4
    %675 = vperm.xlu0 %674, %v155
    %v676 = vpop.permute.xlu0 %675
    %677 = vset.pattern.permute.xlu0 4
    %678 = vperm.xlu0 %677, %v156
    %v679 = vpop.permute.xlu0 %678
    %680 = vset.pattern.permute.xlu0 4
    %681 = vperm.xlu0 %680, %v157
    %v682 = vpop.permute.xlu0 %681
    %v683 = vrot.slane %v673, 3
    %v684 = vrot.slane %v676, 3
    %v685 = vsel %vm139, %v683, %v684
    %v686 = vrot.slane %v679, 3
    %v687 = vsel %vm139, %v684, %v686
    %v688 = vrot.slane %v682, 3
    %v689 = vsel %vm139, %v686, %v688
    %v695 = vmul.f32 %v152, %v683
    %v696 = vmul.f32 %v142, %v685
    %v697 = vmul.f32 %v144, %v687
    %v698 = vmul.f32 %v146, %v689
    %v699 = vmul.f32 %v153, %v688
    %v700 = vpack.c.bf16 %v696, %v695
    %v701 = vpack.c.bf16 %v698, %v697
    %v702 = vpack.c.bf16 %v699, %v699
    %s703 = scalar_lea.vmem %s6, 256
    %v704 = vld [vmem:[%s703] sm:$0xf]
    %v705 = vld [vmem:[%s703 + $0x4] sm:$0xf]
    %v706 = vld [vmem:[%s703 + $0x8] sm:$0xf]
    %v707 = vld [vmem:[%s703 + $0xc] sm:$0xf]
    %v708 = vld [vmem:[%s703 + $0x10] sm:$0xf]
    %v709 = vld [vmem:[%s703 + $0x14] sm:$0xf]
    %v710 = vld [vmem:[%s703 + $0x18] sm:$0xf]
    %v711 = vld [vmem:[%s703 + $0x1c] sm:$0xf]
    %v712 = vld [vmem:[%s703 + $0x20] sm:$0xf]
    %v713 = vld [vmem:[%s703 + $0x24] sm:$0xf]
    %v714 = vld [vmem:[%s703 + $0x28] sm:$0xf]
    %v715 = vld [vmem:[%s703 + $0x2c] sm:$0xf]
    %v716 = vld [vmem:[%s703 + $0x30] sm:$0xf]
    %v717 = vld [vmem:[%s703 + $0x34] sm:$0xf]
    %v718 = vld [vmem:[%s703 + $0x38] sm:$0xf]
    %v719 = vld [vmem:[%s703 + $0x3c] sm:$0xf]
    %vm720 = vsmask.f32 5376
    %v722 = vshrl.u32 %v700, 16
    %v724 = vrot.slane %v722, 2
    %v725 = vshll.u32 %v700, 16
    %v727 = vrot.slane %v725, 3
    %v728 = vor.u32 %v724, %v727
    %v730 = vshrl.u32 %v701, 16
    %v732 = vrot.slane %v730, 2
    %v733 = vshll.u32 %v701, 16
    %v735 = vrot.slane %v733, 3
    %v736 = vor.u32 %v732, %v735
    %v737 = vsel %vm720, %v728, %v736
    %v739 = vshrl.u32 %v702, 16
    %v741 = vrot.slane %v739, 2
    %v742 = vshll.u32 %v702, 16
    %v744 = vrot.slane %v742, 3
    %v745 = vor.u32 %v741, %v744
    %v746 = vsel %vm720, %v736, %v745
    %v765 = vunpack.c.l.b16 %v704
    %v766 = vunpack.c.l.b16 %v705
    %v767 = vunpack.c.l.b16 %v706
    %v768 = vunpack.c.l.b16 %v707
    %v769 = vunpack.c.l.b16 %v708
    %v770 = vunpack.c.l.b16 %v709
    %v771 = vunpack.c.l.b16 %v710
    %v772 = vunpack.c.l.b16 %v711
    %v773 = vunpack.c.l.b16 %v712
    %v774 = vunpack.c.l.b16 %v713
    %v775 = vunpack.c.l.b16 %v714
    %v776 = vunpack.c.l.b16 %v715
    %v777 = vunpack.c.l.b16 %v716
    %v778 = vunpack.c.l.b16 %v717
    %v779 = vunpack.c.l.b16 %v718
    %v780 = vunpack.c.l.b16 %v719
    %v781 = vpack.c.b16 %v766, %v765
    %v782 = vpack.c.b16 %v768, %v767
    %v783 = vpack.c.b16 %v770, %v769
    %v784 = vpack.c.b16 %v772, %v771
    %v785 = vpack.c.b16 %v774, %v773
    %v786 = vpack.c.b16 %v776, %v775
    %v787 = vpack.c.b16 %v778, %v777
    %v788 = vpack.c.b16 %v780, %v779
    %797 = vmatpush.bf16.msra.mxu0 %v788
    %798 = vmatpush.bf16.msra.mxu0 %v787
    %799 = vmatpush.bf16.msra.mxu0 %v786
    %800 = vmatpush.bf16.msra.mxu0 %v785
    %801 = vmatpush.bf16.msra.mxu0 %v784
    %802 = vmatpush.bf16.msra.mxu0 %v783
    %803 = vmatpush.bf16.msra.mxu0 %v782
    %804 = vmatpush.bf16.msra.mxu0 %v781
    %805 = vmatmul.bf16.gmra.mxu0 %v737
    %v806 = vpop.f32.mrf.mxu0
    %v807 = vadd.f32 0.0, %v806
    %v808 = vpop.f32.mrf.mxu0
    %v809 = vadd.f32 0.0, %v808
    %810 = vmatmul.bf16.gmra.mxu0 %v746
    %v811 = vpop.f32.mrf.mxu0
    %v812 = vadd.f32 0.0, %v811
    %v813 = vpop.f32.mrf.mxu0
    %v814 = vadd.f32 0.0, %v813
    %815 = vdwg.mxu0
    %v816 = vadd.f32 %v667, %v807
    %v817 = vadd.f32 %v668, %v809
    %v818 = vadd.f32 %v669, %v812
    %v819 = vadd.f32 %v670, %v814
    %820 = vset.pattern.permute.xlu0 5
    %821 = vperm.xlu0 %820, %v154
    %v822 = vpop.permute.xlu0 %821
    %823 = vset.pattern.permute.xlu0 5
    %824 = vperm.xlu0 %823, %v155
    %v825 = vpop.permute.xlu0 %824
    %826 = vset.pattern.permute.xlu0 5
    %827 = vperm.xlu0 %826, %v156
    %v828 = vpop.permute.xlu0 %827
    %829 = vset.pattern.permute.xlu0 5
    %830 = vperm.xlu0 %829, %v157
    %v831 = vpop.permute.xlu0 %830
    %vm832 = vcmask 1045504
    %v833 = vrot.slane %v822, 2
    %v834 = vrot.slane %v825, 2
    %v835 = vsel %vm832, %v833, %v834
    %v836 = vrot.slane %v828, 2
    %v837 = vsel %vm832, %v834, %v836
    %v838 = vrot.slane %v831, 2
    %v839 = vsel %vm832, %v836, %v838
    %v845 = vmul.f32 %v152, %v833
    %v846 = vmul.f32 %v142, %v835
    %v847 = vmul.f32 %v144, %v837
    %v848 = vmul.f32 %v146, %v839
    %v849 = vmul.f32 %v153, %v838
    %v850 = vpack.c.bf16 %v846, %v845
    %v851 = vpack.c.bf16 %v848, %v847
    %v852 = vpack.c.bf16 %v849, %v849
    %s853 = scalar_lea.vmem %s6, 320
    %v854 = vld [vmem:[%s853] sm:$0xf]
    %v855 = vld [vmem:[%s853 + $0x4] sm:$0xf]
    %v856 = vld [vmem:[%s853 + $0x8] sm:$0xf]
    %v857 = vld [vmem:[%s853 + $0xc] sm:$0xf]
    %v858 = vld [vmem:[%s853 + $0x10] sm:$0xf]
    %v859 = vld [vmem:[%s853 + $0x14] sm:$0xf]
    %v860 = vld [vmem:[%s853 + $0x18] sm:$0xf]
    %v861 = vld [vmem:[%s853 + $0x1c] sm:$0xf]
    %v862 = vld [vmem:[%s853 + $0x20] sm:$0xf]
    %v863 = vld [vmem:[%s853 + $0x24] sm:$0xf]
    %v864 = vld [vmem:[%s853 + $0x28] sm:$0xf]
    %v865 = vld [vmem:[%s853 + $0x2c] sm:$0xf]
    %v866 = vld [vmem:[%s853 + $0x30] sm:$0xf]
    %v867 = vld [vmem:[%s853 + $0x34] sm:$0xf]
    %v868 = vld [vmem:[%s853 + $0x38] sm:$0xf]
    %v869 = vld [vmem:[%s853 + $0x3c] sm:$0xf]
    %vm873 = vcmask 1044480
    %v874 = vrot.slane %v850, 3
    %v875 = vrot.slane %v851, 3
    %v876 = vsel %vm873, %v874, %v875
    %v877 = vrot.slane %v852, 3
    %v878 = vsel %vm873, %v875, %v877
    %v897 = vunpack.c.l.b16 %v854
    %v898 = vunpack.c.l.b16 %v855
    %v899 = vunpack.c.l.b16 %v856
    %v900 = vunpack.c.l.b16 %v857
    %v901 = vunpack.c.l.b16 %v858
    %v902 = vunpack.c.l.b16 %v859
    %v903 = vunpack.c.l.b16 %v860
    %v904 = vunpack.c.l.b16 %v861
    %v905 = vunpack.c.l.b16 %v862
    %v906 = vunpack.c.l.b16 %v863
    %v907 = vunpack.c.l.b16 %v864
    %v908 = vunpack.c.l.b16 %v865
    %v909 = vunpack.c.l.b16 %v866
    %v910 = vunpack.c.l.b16 %v867
    %v911 = vunpack.c.l.b16 %v868
    %v912 = vunpack.c.l.b16 %v869
    %v913 = vpack.c.b16 %v898, %v897
    %v914 = vpack.c.b16 %v900, %v899
    %v915 = vpack.c.b16 %v902, %v901
    %v916 = vpack.c.b16 %v904, %v903
    %v917 = vpack.c.b16 %v906, %v905
    %v918 = vpack.c.b16 %v908, %v907
    %v919 = vpack.c.b16 %v910, %v909
    %v920 = vpack.c.b16 %v912, %v911
    %929 = vmatpush.bf16.msra.mxu0 %v920
    %930 = vmatpush.bf16.msra.mxu0 %v919
    %931 = vmatpush.bf16.msra.mxu0 %v918
    %932 = vmatpush.bf16.msra.mxu0 %v917
    %933 = vmatpush.bf16.msra.mxu0 %v916
    %934 = vmatpush.bf16.msra.mxu0 %v915
    %935 = vmatpush.bf16.msra.mxu0 %v914
    %936 = vmatpush.bf16.msra.mxu0 %v913
    %937 = vmatmul.bf16.gmra.mxu0 %v876
    %v938 = vpop.f32.mrf.mxu0
    %v939 = vadd.f32 0.0, %v938
    %v940 = vpop.f32.mrf.mxu0
    %v941 = vadd.f32 0.0, %v940
    %942 = vmatmul.bf16.gmra.mxu0 %v878
    %v943 = vpop.f32.mrf.mxu0
    %v944 = vadd.f32 0.0, %v943
    %v945 = vpop.f32.mrf.mxu0
    %v946 = vadd.f32 0.0, %v945
    %947 = vdwg.mxu0
    %v948 = vadd.f32 %v816, %v939
    %v949 = vadd.f32 %v817, %v941
    %v950 = vadd.f32 %v818, %v944
    %v951 = vadd.f32 %v819, %v946
    %952 = vset.pattern.permute.xlu0 6
    %953 = vperm.xlu0 %952, %v154
    %v954 = vpop.permute.xlu0 %953
    %956 = vset.pattern.permute.xlu0 6
    %957 = vperm.xlu0 %956, %v155
    %v958 = vpop.permute.xlu0 %957
    %960 = vset.pattern.permute.xlu0 6
    %961 = vperm.xlu0 %960, %v156
    %v962 = vpop.permute.xlu0 %961
    %964 = vset.pattern.permute.xlu0 6
    %965 = vperm.xlu0 %964, %v157
    %v966 = vpop.permute.xlu0 %965
    %v968 = vmul.f32 %v142, %v954
    %v969 = vmul.f32 %v144, %v958
    %v970 = vmul.f32 %v146, %v962
    %v971 = vmul.f32 %v153, %v966
    %v972 = vpack.c.bf16 %v969, %v968
    %v973 = vpack.c.bf16 %v971, %v970
    %s974 = scalar_lea.vmem %s6, 384
    %v975 = vld [vmem:[%s974] sm:$0xf]
    %v976 = vld [vmem:[%s974 + $0x4] sm:$0xf]
    %v977 = vld [vmem:[%s974 + $0x8] sm:$0xf]
    %v978 = vld [vmem:[%s974 + $0xc] sm:$0xf]
    %v979 = vld [vmem:[%s974 + $0x10] sm:$0xf]
    %v980 = vld [vmem:[%s974 + $0x14] sm:$0xf]
    %v981 = vld [vmem:[%s974 + $0x18] sm:$0xf]
    %v982 = vld [vmem:[%s974 + $0x1c] sm:$0xf]
    %v983 = vld [vmem:[%s974 + $0x20] sm:$0xf]
    %v984 = vld [vmem:[%s974 + $0x24] sm:$0xf]
    %v985 = vld [vmem:[%s974 + $0x28] sm:$0xf]
    %v986 = vld [vmem:[%s974 + $0x2c] sm:$0xf]
    %v987 = vld [vmem:[%s974 + $0x30] sm:$0xf]
    %v988 = vld [vmem:[%s974 + $0x34] sm:$0xf]
    %v989 = vld [vmem:[%s974 + $0x38] sm:$0xf]
    %v990 = vld [vmem:[%s974 + $0x3c] sm:$0xf]
    %v1007 = vunpack.c.l.b16 %v975
    %v1008 = vunpack.c.l.b16 %v976
    %v1009 = vunpack.c.l.b16 %v977
    %v1010 = vunpack.c.l.b16 %v978
    %v1011 = vunpack.c.l.b16 %v979
    %v1012 = vunpack.c.l.b16 %v980
    %v1013 = vunpack.c.l.b16 %v981
    %v1014 = vunpack.c.l.b16 %v982
    %v1015 = vunpack.c.l.b16 %v983
    %v1016 = vunpack.c.l.b16 %v984
    %v1017 = vunpack.c.l.b16 %v985
    %v1018 = vunpack.c.l.b16 %v986
    %v1019 = vunpack.c.l.b16 %v987
    %v1020 = vunpack.c.l.b16 %v988
    %v1021 = vunpack.c.l.b16 %v989
    %v1022 = vunpack.c.l.b16 %v990
    %v1023 = vpack.c.b16 %v1008, %v1007
    %v1024 = vpack.c.b16 %v1010, %v1009
    %v1025 = vpack.c.b16 %v1012, %v1011
    %v1026 = vpack.c.b16 %v1014, %v1013
    %v1027 = vpack.c.b16 %v1016, %v1015
    %v1028 = vpack.c.b16 %v1018, %v1017
    %v1029 = vpack.c.b16 %v1020, %v1019
    %v1030 = vpack.c.b16 %v1022, %v1021
    %1039 = vmatpush.bf16.msra.mxu0 %v1030
    %1040 = vmatpush.bf16.msra.mxu0 %v1029
    %1041 = vmatpush.bf16.msra.mxu0 %v1028
    %1042 = vmatpush.bf16.msra.mxu0 %v1027
    %1043 = vmatpush.bf16.msra.mxu0 %v1026
    %1044 = vmatpush.bf16.msra.mxu0 %v1025
    %1045 = vmatpush.bf16.msra.mxu0 %v1024
    %1046 = vmatpush.bf16.msra.mxu0 %v1023
    %1047 = vmatmul.bf16.gmra.mxu0 %v972
    %v1048 = vpop.f32.mrf.mxu0
    %v1049 = vadd.f32 0.0, %v1048
    %v1050 = vpop.f32.mrf.mxu0
    %v1051 = vadd.f32 0.0, %v1050
    %1052 = vmatmul.bf16.gmra.mxu0 %v973
    %v1053 = vpop.f32.mrf.mxu0
    %v1054 = vadd.f32 0.0, %v1053
    %v1055 = vpop.f32.mrf.mxu0
    %v1056 = vadd.f32 0.0, %v1055
    %1057 = vdwg.mxu0
    %v1058 = vadd.f32 %v948, %v1049
    %v1059 = vadd.f32 %v949, %v1051
    %v1060 = vadd.f32 %v950, %v1054
    %v1061 = vadd.f32 %v951, %v1056
    %1062 = vset.pattern.permute.xlu0 7
    %1063 = vperm.xlu0 %1062, %v154
    %v1064 = vpop.permute.xlu0 %1063
    %1065 = vset.pattern.permute.xlu0 7
    %1066 = vperm.xlu0 %1065, %v155
    %v1067 = vpop.permute.xlu0 %1066
    %1068 = vset.pattern.permute.xlu0 7
    %1069 = vperm.xlu0 %1068, %v156
    %v1070 = vpop.permute.xlu0 %1069
    %1071 = vset.pattern.permute.xlu0 7
    %1072 = vperm.xlu0 %1071, %v157
    %v1073 = vpop.permute.xlu0 %1072
    %v1074 = vrot.slane %v1064, 7
    %v1075 = vrot.slane %v1067, 7
    %v1076 = vsel %vm212, %v1074, %v1075
    %v1077 = vrot.slane %v1070, 7
    %v1078 = vsel %vm212, %v1075, %v1077
    %v1079 = vrot.slane %v1073, 7
    %v1080 = vsel %vm212, %v1077, %v1079
    %v1086 = vmul.f32 %v142, %v1074
    %v1087 = vmul.f32 %v144, %v1076
    %v1088 = vmul.f32 %v146, %v1078
    %v1089 = vmul.f32 %v153, %v1080
    %v1090 = vmul.f32 %v1079, 0.0
    %v1091 = vpack.c.bf16 %v1087, %v1086
    %v1092 = vpack.c.bf16 %v1089, %v1088
    %v1093 = vpack.c.bf16 %v1090, %v1090
    %s1094 = scalar_lea.vmem %s6, 448
    %v1095 = vld [vmem:[%s1094] sm:$0xf]
    %v1096 = vld [vmem:[%s1094 + $0x4] sm:$0xf]
    %v1097 = vld [vmem:[%s1094 + $0x8] sm:$0xf]
    %v1098 = vld [vmem:[%s1094 + $0xc] sm:$0xf]
    %v1099 = vld [vmem:[%s1094 + $0x10] sm:$0xf]
    %v1100 = vld [vmem:[%s1094 + $0x14] sm:$0xf]
    %v1101 = vld [vmem:[%s1094 + $0x18] sm:$0xf]
    %v1102 = vld [vmem:[%s1094 + $0x1c] sm:$0xf]
    %v1103 = vld [vmem:[%s1094 + $0x20] sm:$0xf]
    %v1104 = vld [vmem:[%s1094 + $0x24] sm:$0xf]
    %v1105 = vld [vmem:[%s1094 + $0x28] sm:$0xf]
    %v1106 = vld [vmem:[%s1094 + $0x2c] sm:$0xf]
    %v1107 = vld [vmem:[%s1094 + $0x30] sm:$0xf]
    %v1108 = vld [vmem:[%s1094 + $0x34] sm:$0xf]
    %v1109 = vld [vmem:[%s1094 + $0x38] sm:$0xf]
    %v1110 = vld [vmem:[%s1094 + $0x3c] sm:$0xf]
    %v1112 = vshrl.u32 %v1091, 16
    %v1114 = vshll.u32 %v1091, 16
    %v1116 = vrot.slane %v1114, 1
    %v1117 = vor.u32 %v1112, %v1116
    %v1119 = vshll.u32 %v1092, 16
    %v1121 = vrot.slane %v1119, 1
    %v1122 = vsel %vm250, %v1117, %v1121
    %v1123 = vshrl.u32 %v1092, 16
    %v1125 = vor.u32 %v1123, %v1121
    %v1127 = vshll.u32 %v1093, 16
    %v1129 = vrot.slane %v1127, 1
    %v1130 = vsel %vm250, %v1125, %v1129
    %v1149 = vunpack.c.l.b16 %v1095
    %v1150 = vunpack.c.l.b16 %v1096
    %v1151 = vunpack.c.l.b16 %v1097
    %v1152 = vunpack.c.l.b16 %v1098
    %v1153 = vunpack.c.l.b16 %v1099
    %v1154 = vunpack.c.l.b16 %v1100
    %v1155 = vunpack.c.l.b16 %v1101
    %v1156 = vunpack.c.l.b16 %v1102
    %v1157 = vunpack.c.l.b16 %v1103
    %v1158 = vunpack.c.l.b16 %v1104
    %v1159 = vunpack.c.l.b16 %v1105
    %v1160 = vunpack.c.l.b16 %v1106
    %v1161 = vunpack.c.l.b16 %v1107
    %v1162 = vunpack.c.l.b16 %v1108
    %v1163 = vunpack.c.l.b16 %v1109
    %v1164 = vunpack.c.l.b16 %v1110
    %v1165 = vpack.c.b16 %v1150, %v1149
    %v1166 = vpack.c.b16 %v1152, %v1151
    %v1167 = vpack.c.b16 %v1154, %v1153
    %v1168 = vpack.c.b16 %v1156, %v1155
    %v1169 = vpack.c.b16 %v1158, %v1157
    %v1170 = vpack.c.b16 %v1160, %v1159
    %v1171 = vpack.c.b16 %v1162, %v1161
    %v1172 = vpack.c.b16 %v1164, %v1163
    %1181 = vmatpush.bf16.msra.mxu0 %v1172
    %1182 = vmatpush.bf16.msra.mxu0 %v1171
    %1183 = vmatpush.bf16.msra.mxu0 %v1170
    %1184 = vmatpush.bf16.msra.mxu0 %v1169
    %1185 = vmatpush.bf16.msra.mxu0 %v1168
    %1186 = vmatpush.bf16.msra.mxu0 %v1167
    %1187 = vmatpush.bf16.msra.mxu0 %v1166
    %1188 = vmatpush.bf16.msra.mxu0 %v1165
    %1189 = vmatmul.bf16.gmra.mxu0 %v1122
    %v1190 = vpop.f32.mrf.mxu0
    %v1191 = vadd.f32 0.0, %v1190
    %v1192 = vpop.f32.mrf.mxu0
    %v1193 = vadd.f32 0.0, %v1192
    %1194 = vmatmul.bf16.gmra.mxu0 %v1130
    %v1195 = vpop.f32.mrf.mxu0
    %v1196 = vadd.f32 0.0, %v1195
    %v1197 = vpop.f32.mrf.mxu0
    %v1198 = vadd.f32 0.0, %v1197
    %1199 = vdwg.mxu0
    %v1200 = vadd.f32 %v1058, %v1191
    %v1201 = vadd.f32 %v1059, %v1193
    %v1202 = vadd.f32 %v1060, %v1196
    %v1203 = vadd.f32 %v1061, %v1198
    %1204 = vset.pattern.permute.xlu0 8
    %1205 = vperm.xlu0 %1204, %v154
    %v1206 = vpop.permute.xlu0 %1205
    %1207 = vset.pattern.permute.xlu0 8
    %1208 = vperm.xlu0 %1207, %v155
    %v1209 = vpop.permute.xlu0 %1208
    %1210 = vset.pattern.permute.xlu0 8
    %1211 = vperm.xlu0 %1210, %v156
    %v1212 = vpop.permute.xlu0 %1211
    %1213 = vset.pattern.permute.xlu0 8
    %1214 = vperm.xlu0 %1213, %v157
    %v1215 = vpop.permute.xlu0 %1214
    %v1216 = vrot.slane %v1206, 6
    %v1217 = vrot.slane %v1209, 6
    %v1218 = vsel %vm419, %v1216, %v1217
    %v1219 = vrot.slane %v1212, 6
    %v1220 = vsel %vm419, %v1217, %v1219
    %v1221 = vrot.slane %v1215, 6
    %v1222 = vsel %vm419, %v1219, %v1221
    %v1228 = vmul.f32 %v142, %v1216
    %v1229 = vmul.f32 %v144, %v1218
    %v1230 = vmul.f32 %v146, %v1220
    %v1231 = vmul.f32 %v153, %v1222
    %v1232 = vmul.f32 %v1221, 0.0
    %v1233 = vpack.c.bf16 %v1229, %v1228
    %v1234 = vpack.c.bf16 %v1231, %v1230
    %v1235 = vpack.c.bf16 %v1232, %v1232
    %s1236 = scalar_lea.vmem %s6, 512
    %v1237 = vld [vmem:[%s1236] sm:$0xf]
    %v1238 = vld [vmem:[%s1236 + $0x4] sm:$0xf]
    %v1239 = vld [vmem:[%s1236 + $0x8] sm:$0xf]
    %v1240 = vld [vmem:[%s1236 + $0xc] sm:$0xf]
    %v1241 = vld [vmem:[%s1236 + $0x10] sm:$0xf]
    %v1242 = vld [vmem:[%s1236 + $0x14] sm:$0xf]
    %v1243 = vld [vmem:[%s1236 + $0x18] sm:$0xf]
    %v1244 = vld [vmem:[%s1236 + $0x1c] sm:$0xf]
    %v1245 = vld [vmem:[%s1236 + $0x20] sm:$0xf]
    %v1246 = vld [vmem:[%s1236 + $0x24] sm:$0xf]
    %v1247 = vld [vmem:[%s1236 + $0x28] sm:$0xf]
    %v1248 = vld [vmem:[%s1236 + $0x2c] sm:$0xf]
    %v1249 = vld [vmem:[%s1236 + $0x30] sm:$0xf]
    %v1250 = vld [vmem:[%s1236 + $0x34] sm:$0xf]
    %v1251 = vld [vmem:[%s1236 + $0x38] sm:$0xf]
    %v1252 = vld [vmem:[%s1236 + $0x3c] sm:$0xf]
    %v1256 = vrot.slane %v1233, 1
    %v1257 = vrot.slane %v1234, 1
    %v1258 = vsel %vm460, %v1256, %v1257
    %v1259 = vrot.slane %v1235, 1
    %v1260 = vsel %vm460, %v1257, %v1259
    %v1279 = vunpack.c.l.b16 %v1237
    %v1280 = vunpack.c.l.b16 %v1238
    %v1281 = vunpack.c.l.b16 %v1239
    %v1282 = vunpack.c.l.b16 %v1240
    %v1283 = vunpack.c.l.b16 %v1241
    %v1284 = vunpack.c.l.b16 %v1242
    %v1285 = vunpack.c.l.b16 %v1243
    %v1286 = vunpack.c.l.b16 %v1244
    %v1287 = vunpack.c.l.b16 %v1245
    %v1288 = vunpack.c.l.b16 %v1246
    %v1289 = vunpack.c.l.b16 %v1247
    %v1290 = vunpack.c.l.b16 %v1248
    %v1291 = vunpack.c.l.b16 %v1249
    %v1292 = vunpack.c.l.b16 %v1250
    %v1293 = vunpack.c.l.b16 %v1251
    %v1294 = vunpack.c.l.b16 %v1252
    %v1295 = vpack.c.b16 %v1280, %v1279
    %v1296 = vpack.c.b16 %v1282, %v1281
    %v1297 = vpack.c.b16 %v1284, %v1283
    %v1298 = vpack.c.b16 %v1286, %v1285
    %v1299 = vpack.c.b16 %v1288, %v1287
    %v1300 = vpack.c.b16 %v1290, %v1289
    %v1301 = vpack.c.b16 %v1292, %v1291
    %v1302 = vpack.c.b16 %v1294, %v1293
    %1311 = vmatpush.bf16.msra.mxu0 %v1302
    %1312 = vmatpush.bf16.msra.mxu0 %v1301
    %1313 = vmatpush.bf16.msra.mxu0 %v1300
    %1314 = vmatpush.bf16.msra.mxu0 %v1299
    %1315 = vmatpush.bf16.msra.mxu0 %v1298
    %1316 = vmatpush.bf16.msra.mxu0 %v1297
    %1317 = vmatpush.bf16.msra.mxu0 %v1296
    %1318 = vmatpush.bf16.msra.mxu0 %v1295
    %1319 = vmatmul.bf16.gmra.mxu0 %v1258
    %v1320 = vpop.f32.mrf.mxu0
    %v1321 = vadd.f32 0.0, %v1320
    %v1322 = vpop.f32.mrf.mxu0
    %v1323 = vadd.f32 0.0, %v1322
    %1324 = vmatmul.bf16.gmra.mxu0 %v1260
    %v1325 = vpop.f32.mrf.mxu0
    %v1326 = vadd.f32 0.0, %v1325
    %v1327 = vpop.f32.mrf.mxu0
    %v1328 = vadd.f32 0.0, %v1327
    %1329 = vdwg.mxu0
    %v1330 = vadd.f32 %v1200, %v1321
    %v1331 = vadd.f32 %v1201, %v1323
    %v1332 = vadd.f32 %v1202, %v1326
    %v1333 = vadd.f32 %v1203, %v1328
    %vm1334 = vcmask 261120
    %1335 = vst.msk [vmem:[#allocation2] sm:$0xff] %vm1334, %v1330
    %1336 = vst.msk [vmem:[#allocation2 + $0x8] sm:$0xff] %vm1334, %v1331
    %1337 = vst.msk [vmem:[#allocation2 + $0x10] sm:$0xff] %vm1334, %v1332
    %1338 = vst.msk [vmem:[#allocation2 + $0x18] sm:$0xff] %vm1334, %v1333
    // Predicated region
    $region34: #{dense_layer_pallas.1} parent=1 // pred_check
      _
    $region35: #{dense_layer_pallas.1} parent=1 // pred_check_branch
      %1340 = sbr.rel (0) target = $region37
    $region36: #{dense_layer_pallas.1} parent=1 // pred_region
      %1342 = vsyncadd [#allocation3], 0
      %s1343 = sshll.u32 [#allocation2], 4
      %s1344 = int_to_ptr.vmem [resolvable:$true] %s1343
      %s1345 = sshll.u32 %s8, 4
      %s1346 = int_to_ptr.hbm [resolvable:$true] %s1345
      %1351 = dma.vmem_to_hbm [thread:$0]  %s1344, 512, %s1346, [#allocation3], 128, 128, 8
    $region37: #{dense_layer_pallas.1} parent=1 // pred_fallthru
      _
    // Predicated region
    $region38: #{dense_layer_pallas.1} parent=1 // pred_check
      _
    $region39: #{dense_layer_pallas.1} parent=1 // pred_check_branch
      %1353 = sbr.rel (0) target = $region41
    $region40: #{dense_layer_pallas.1} parent=1 // pred_region
      %1355 = dma.done [#allocation3], 512
    $region41: #{dense_layer_pallas.1} parent=1 // pred_fallthru
      _
    %1356 = vsyncpa [#allocation3], 1

</llo_original>
